<compile_context>
chip_gen: v5e
topology: v5e:2x2
jax: 0.10.0
libtpu: 0.0.40
codegen_flags: <defaults>
</compile_context>

<pallas_src>
import jax
import jax.numpy as jnp
from jax.experimental import pallas as pl
from jax.experimental.pallas import tpu as pltpu

LANE = 128          # vreg lane width
SUBLANE = 8         # f32 sublane count
IN_FEATURES = 3


def linear_kernel(b_ref, w_ref, x_ref, o_ref):
    # x_ref: (ts, 384) f32 — 128 samples per row, 3 features interleaved
    #        (the natural row-major layout of the (N, 3) input, no transpose).
    # w_ref: (384, 128) f32 — VMEM-resident de-interleave + weight matrix,
    #        W[3*j0 + f, j] = w[f] * (j0 == j).
    # b_ref: (1,) f32 in SMEM.
    # One MXU matmul does the de-interleave and the weight apply; the bias add
    # stays on the VPU. The kernel remains HBM-DMA-bound.
    o_ref[...] = (
        jnp.dot(x_ref[...], w_ref[...], preferred_element_type=jnp.float32)
        + b_ref[0]
    ).astype(o_ref.dtype)


def poly_model_forward(x, w, b, *, row_tile=2048):
    """Pallas forward of nn.Linear(3, 1).

    x: (N, 3) float32
    w: (1, 3) float32   (PyTorch convention: (out_features, in_features))
    b: (1,)   float32
    returns (N, 1) float32
    """
    N, K = x.shape
    assert K == IN_FEATURES and w.shape == (1, IN_FEATURES) and b.shape == (1,)

    # ---- layout plumbing (row-major preserved; tail pad only) ----
    rows = pl.cdiv(N, LANE)                        # rows of 128 samples
    rows_pad = pl.cdiv(rows, SUBLANE) * SUBLANE    # <= 7 rows of over-pad
    n_pad = rows_pad * LANE

    if n_pad != N:
        x = jnp.pad(x, ((0, n_pad - N), (0, 0)))   # tail pad only (no transpose)
    # Free contiguous reshape: (n_pad, 3) -> (rows_pad, 384).
    x_rows = x.reshape(rows_pad, IN_FEATURES * LANE)

    # Constant de-interleave + weight matrix: (384, 128), 192 KiB.
    w_big = (
        w.reshape(1, IN_FEATURES, 1).astype(x.dtype)
        * jnp.eye(LANE, dtype=x.dtype)[:, None, :]
    ).reshape(IN_FEATURES * LANE, LANE)
    b_flat = b.reshape(1).astype(jnp.float32)

    # Tile size: multiple of 8 rows; default 2048 rows (~4 MiB payload/step,
    # ~8.2 MiB double-buffered) fits every generation's default scoped VMEM.
    row_tile = max(SUBLANE, (row_tile // SUBLANE) * SUBLANE)
    ts = min(row_tile, rows_pad)
    grid = (pl.cdiv(rows_pad, ts),)                # last tile may be partial

    out = pl.pallas_call(
        linear_kernel,
        out_shape=jax.ShapeDtypeStruct((rows_pad, LANE), x.dtype),
        grid=grid,
        in_specs=[
            # Bias: one scalar, resident in SMEM.
            pl.BlockSpec(memory_space=pltpu.MemorySpace.SMEM),
            # Weights: full (384,128) block, constant index_map -> DMA'd once,
            # VMEM-resident across all grid steps.
            pl.BlockSpec((IN_FEATURES * LANE, LANE), lambda i: (0, 0)),
            # x: one (ts, 384) row-major tile per step, auto double-buffered.
            pl.BlockSpec((ts, IN_FEATURES * LANE), lambda i: (i, 0)),
        ],
        out_specs=pl.BlockSpec((ts, LANE), lambda i: (i, 0)),
        compiler_params=pltpu.CompilerParams(
            dimension_semantics=("parallel",),     # v7x: both TCs issue DMAs
        ),
        cost_estimate=pl.CostEstimate(
            flops=2 * IN_FEATURES * n_pad,                     # ~6N FMAs
            transcendentals=0,
            bytes_accessed=(IN_FEATURES + 1) * 4 * n_pad,      # ~16N bytes
        ),
    )(b_flat, w_big, x_rows)

    out_flat = out.reshape(n_pad, 1)
    # No slice emitted when the batch already fills whole (8,128) row blocks.
    return out_flat if n_pad == N else out_flat[:N]


if __name__ == "__main__":
    key = jax.random.PRNGKey(0)
    kx, kw, kb, kx2 = jax.random.split(key, 4)

    IN, OUT = 3, 1
    # Deterministic init matching nn.Linear's default U(-1/sqrt(in), 1/sqrt(in)).
    bound = 1.0 / jnp.sqrt(jnp.float32(IN))
    w = jax.random.uniform(kw, (OUT, IN), dtype=jnp.float32, minval=-bound, maxval=bound)
    b = jax.random.uniform(kb, (OUT,), dtype=jnp.float32, minval=-bound, maxval=bound)

    # Small example consistent with the module: batch=8, in_features=3.
    N1 = 8
    x1 = jax.random.normal(kx, (N1, IN), dtype=jnp.float32)
    out1 = jax.block_until_ready(poly_model_forward(x1, w, b))
    ref1 = x1 @ w.T + b
    assert out1.shape == (N1, OUT)
    assert jnp.allclose(out1, ref1, atol=1e-5, rtol=1e-5)

    # Multi-tile, divisible-grid path: N=3000 -> 24 rows, row_tile=8 -> 3 tiles.
    N2 = 3000
    x2 = jax.random.normal(kx2, (N2, IN), dtype=jnp.float32)
    out2 = jax.block_until_ready(poly_model_forward(x2, w, b, row_tile=8))
    ref2 = x2 @ w.T + b
    assert out2.shape == (N2, OUT)
    assert jnp.allclose(out2, ref2, atol=1e-5, rtol=1e-5)

    # Partial-last-tile path: 24 rows with row_tile=16 -> boundary block masked.
    out3 = jax.block_until_ready(poly_model_forward(x2, w, b, row_tile=16))
    assert jnp.allclose(out3, ref2, atol=1e-5, rtol=1e-5)

    print("KERNEL_OK")
</pallas_src>

<mosaic_0001>
module attributes {stable_mosaic.version = 11 : i64} {
  func.func @linear_kernel(%arg0: i32, %arg1: memref<1xf32, #tpu.memory_space<smem>>, %arg2: memref<384x128xf32, #tpu.memory_space<vmem>>, %arg3: memref<8x384xf32, #tpu.memory_space<vmem>>, %arg4: memref<8x128xf32, #tpu.memory_space<vmem>>) attributes {dimension_semantics = [#tpu.dimension_semantics<parallel>], iteration_bounds = array<i64: 1>, scalar_prefetch = 0 : i64, scratch_operands = 0 : i64, tpu.core_type = #tpu.core_type<tc>, window_params = [{transform_indices = @transform_0, window_bounds = array<i64: 1>}, {pipeline_mode = #tpu.pipeline_mode<synchronous>, transform_indices = @transform_1, window_bounds = array<i64: 384, 128>}, {transform_indices = @transform_2, window_bounds = array<i64: 8, 384>}, {transform_indices = @transform_3, window_bounds = array<i64: 8, 128>}]} {
    %c0 = arith.constant 0 : index
    %c0_0 = arith.constant 0 : index
    %0 = vector.load %arg3[%c0, %c0_0] : memref<8x384xf32, #tpu.memory_space<vmem>>, vector<8x384xf32>
    %c0_1 = arith.constant 0 : index
    %c0_2 = arith.constant 0 : index
    %1 = vector.load %arg2[%c0_1, %c0_2] : memref<384x128xf32, #tpu.memory_space<vmem>>, vector<384x128xf32>
    %cst = arith.constant dense<0.000000e+00> : vector<8x128xf32>
    %2 = tpu.matmul %0, %1, %cst {dimension_numbers = #tpu.dot_dimension_numbers<[1], [0], [0], [1], [0, 0, 1, 1], [], []>} : vector<8x384xf32>, vector<384x128xf32>, vector<8x128xf32> -> vector<8x128xf32>
    %c0_3 = arith.constant 0 : index
    %3 = memref.load %arg1[%c0_3] : memref<1xf32, #tpu.memory_space<smem>>
    %4 = vector.broadcast %3 : f32 to vector<8x128xf32>
    %5 = arith.addf %2, %4 : vector<8x128xf32>
    %c0_4 = arith.constant 0 : index
    %c0_5 = arith.constant 0 : index
    %6 = vector.load %arg4[%c0_4, %c0_5] : memref<8x128xf32, #tpu.memory_space<vmem>>, vector<8x128xf32>
    tpu.vector_store %arg4[%c0_4, %c0_5], %5 {strides = array<i32>} : memref<8x128xf32, #tpu.memory_space<vmem>>, vector<8x128xf32>,
    return
  }
  func.func @transform_0(%arg0: i32) -> i32 {
    %c0_i32 = arith.constant 0 : i32
    %c0_i32_0 = arith.constant 0 : i32
    return %c0_i32 : i32
  }
  func.func @transform_1(%arg0: i32) -> (i32, i32) {
    %c0_i32 = arith.constant 0 : i32
    %c0_i32_0 = arith.constant 0 : i32
    %c0_i32_1 = arith.constant 0 : i32
    return %c0_i32, %c0_i32_0 : i32, i32
  }
  func.func @transform_2(%arg0: i32) -> (i32, i32) {
    %c0_i32 = arith.constant 0 : i32
    %c0_i32_0 = arith.constant 0 : i32
    return %arg0, %c0_i32 : i32, i32
  }
  func.func @transform_3(%arg0: i32) -> (i32, i32) {
    %c0_i32 = arith.constant 0 : i32
    %c0_i32_0 = arith.constant 0 : i32
    return %arg0, %c0_i32 : i32, i32
  }
}

</mosaic_0001>

<llo_original>
// kernel: tpu_custom_call.1
$region0: #{tpu_custom_call.1}
  #allocation0 [shape = 'u32[]', space=smem, size = 0x4, offset = 0x4, fixed_abs, tag = 'smem constant byte address 0x4 - core index']
  #allocation1 [shape = 'u32[72,128]{1,0:T(1,128)}', space=vmem, size = 0x9000, scoped, tag = 'internal scratch']
  #allocation2 [shape = 'f32[1]{0:T(128)S(6)}', space=smem, size = 0x200, scoped, tag = 'scoped memory for tpu_custom_call.1']
  %s0 = inlined_call_operand.<no memory space> [shape: f32[1], index: 0, kind: input, shape index: {}]
  %s1 = inlined_call_operand.hbm [shape: f32[384,128], index: 1, kind: input, shape index: {}]
  %s2 = inlined_call_operand.hbm [shape: f32[8,384], index: 2, kind: input, shape index: {}]
  %s3 = inlined_call_operand.hbm [shape: f32[8,128], index: 3, kind: output, shape index: {}]
  %s4 = sld [smem:[#allocation0]]
  $region30: #{tpu_custom_call.1} parent=0
    _
  %s6 = ssub.s32 1, %s4
  %s7 = scalar_select 0, %s6, %s4
  %8 = sst [smem:[#allocation2]] %s0
  $region1: #{tpu_custom_call.1} parent=0
    #allocation3 [shape = 'u8[196608]{0}', space=vmem, size = 0x30000, scoped, tag = 'input window, operand 1, single buffered']
    #allocation4 [shape = 's32[1]{0}', space=sflag, size = 0x4, scoped, tag = 'scoped memory for tpu_custom_call.1']
    #allocation5 [shape = 's32[1]{0}', space=sflag, size = 0x4, scoped, tag = 'scoped memory for tpu_custom_call.1']
    #allocation6 [shape = 'u8[12288]{0}', space=vmem, size = 0x3000, scoped, tag = 'input window, operand 2, single buffered']
    #allocation7 [shape = 's32[1]{0}', space=sflag, size = 0x4, scoped, tag = 'scoped memory for tpu_custom_call.1']
    #allocation8 [shape = 'u8[4096]{0}', space=vmem, size = 0x1000, scoped, tag = 'output window, operand 0, single buffered']
    %9 = vsyncpa [#allocation4], 0
    %10 = vsyncpa [#allocation7], 0
    %11 = vsyncpa [#allocation5], 0
    // Predicated region
    $region2: #{tpu_custom_call.1} parent=1 // pred_check
      _
    $region3: #{tpu_custom_call.1} parent=1 // pred_check_branch
      %13 = sbr.rel (0) target = $region5
    $region4: #{tpu_custom_call.1} parent=1 // pred_region
      _
    $region5: #{tpu_custom_call.1} parent=1 // pred_fallthru
      _
    // Predicated region
    $region6: #{tpu_custom_call.1} parent=1 // pred_check
      _
    $region7: #{tpu_custom_call.1} parent=1 // pred_check_branch
      %15 = sbr.rel (0) target = $region9
    $region8: #{tpu_custom_call.1} parent=1 // pred_region
      %17 = vsyncadd [#allocation4], 0
      %s18 = sshll.u32 %s1, 4
      %s19 = int_to_ptr.hbm [resolvable:$true] %s18
      %s20 = sshll.u32 [#allocation3], 4
      %s21 = int_to_ptr.vmem [resolvable:$true] %s20
      %26 = dma.hbm_to_vmem [thread:$0]  %s19, 6144, %s21, [#allocation4], 128, 128, 8
    $region9: #{tpu_custom_call.1} parent=1 // pred_fallthru
      _
    // Predicated region
    $region10: #{tpu_custom_call.1} parent=1 // pred_check
      _
    $region11: #{tpu_custom_call.1} parent=1 // pred_check_branch
      %28 = sbr.rel (0) target = $region13
    $region12: #{tpu_custom_call.1} parent=1 // pred_region
      %30 = vsyncadd [#allocation7], 0
      %s32 = sshll.u32 %s2, 4
      %s33 = int_to_ptr.hbm [resolvable:$true] %s32
      %s34 = sshll.u32 [#allocation6], 4
      %s35 = int_to_ptr.vmem [resolvable:$true] %s34
      %37 = dma.hbm_to_vmem [thread:$0]  %s33, 384, %s35, [#allocation7]
    $region13: #{tpu_custom_call.1} parent=1 // pred_fallthru
      _
    // Predicated region
    $region14: #{tpu_custom_call.1} parent=1 // pred_check
      _
    $region15: #{tpu_custom_call.1} parent=1 // pred_check_branch
      %39 = sbr.rel (0) target = $region17
    $region16: #{tpu_custom_call.1} parent=1 // pred_region
      %41 = dma.done [#allocation4], 6144
    $region17: #{tpu_custom_call.1} parent=1 // pred_fallthru
      _
    // Predicated region
    $region18: #{tpu_custom_call.1} parent=1 // pred_check
      _
    $region19: #{tpu_custom_call.1} parent=1 // pred_check_branch
      %43 = sbr.rel (0) target = $region21
    $region20: #{tpu_custom_call.1} parent=1 // pred_region
      %45 = dma.done [#allocation7], 384
    $region21: #{tpu_custom_call.1} parent=1 // pred_fallthru
      _
    %v46 = vld [vmem:[#allocation6] sm:$0xff]
    %v47 = vld [vmem:[#allocation6 + $0x8] sm:$0xff]
    %v48 = vld [vmem:[#allocation6 + $0x10] sm:$0xff]
    %v49 = vld [vmem:[#allocation3] sm:$0xff]
    %v50 = vld [vmem:[#allocation3 + $0x8] sm:$0xff]
    %v51 = vld [vmem:[#allocation3 + $0x10] sm:$0xff]
    %v52 = vld [vmem:[#allocation3 + $0x18] sm:$0xff]
    %v53 = vld [vmem:[#allocation3 + $0x20] sm:$0xff]
    %v54 = vld [vmem:[#allocation3 + $0x28] sm:$0xff]
    %v55 = vld [vmem:[#allocation3 + $0x30] sm:$0xff]
    %v56 = vld [vmem:[#allocation3 + $0x38] sm:$0xff]
    %v57 = vld [vmem:[#allocation3 + $0x40] sm:$0xff]
    %v58 = vld [vmem:[#allocation3 + $0x48] sm:$0xff]
    %v59 = vld [vmem:[#allocation3 + $0x50] sm:$0xff]
    %v60 = vld [vmem:[#allocation3 + $0x58] sm:$0xff]
    %v61 = vld [vmem:[#allocation3 + $0x60] sm:$0xff]
    %v62 = vld [vmem:[#allocation3 + $0x68] sm:$0xff]
    %v63 = vld [vmem:[#allocation3 + $0x70] sm:$0xff]
    %v64 = vld [vmem:[#allocation3 + $0x78] sm:$0xff]
    %v65 = vld [vmem:[#allocation3 + $0x80] sm:$0xff]
    %v66 = vld [vmem:[#allocation3 + $0x88] sm:$0xff]
    %v67 = vld [vmem:[#allocation3 + $0x90] sm:$0xff]
    %v68 = vld [vmem:[#allocation3 + $0x98] sm:$0xff]
    %v69 = vld [vmem:[#allocation3 + $0xa0] sm:$0xff]
    %v70 = vld [vmem:[#allocation3 + $0xa8] sm:$0xff]
    %v71 = vld [vmem:[#allocation3 + $0xb0] sm:$0xff]
    %v72 = vld [vmem:[#allocation3 + $0xb8] sm:$0xff]
    %v73 = vld [vmem:[#allocation3 + $0xc0] sm:$0xff]
    %v74 = vld [vmem:[#allocation3 + $0xc8] sm:$0xff]
    %v75 = vld [vmem:[#allocation3 + $0xd0] sm:$0xff]
    %v76 = vld [vmem:[#allocation3 + $0xd8] sm:$0xff]
    %v77 = vld [vmem:[#allocation3 + $0xe0] sm:$0xff]
    %v78 = vld [vmem:[#allocation3 + $0xe8] sm:$0xff]
    %v79 = vld [vmem:[#allocation3 + $0xf0] sm:$0xff]
    %v80 = vld [vmem:[#allocation3 + $0xf8] sm:$0xff]
    %v81 = vld [vmem:[#allocation3 + $0x100] sm:$0xff]
    %v82 = vld [vmem:[#allocation3 + $0x108] sm:$0xff]
    %v83 = vld [vmem:[#allocation3 + $0x110] sm:$0xff]
    %v84 = vld [vmem:[#allocation3 + $0x118] sm:$0xff]
    %v85 = vld [vmem:[#allocation3 + $0x120] sm:$0xff]
    %v86 = vld [vmem:[#allocation3 + $0x128] sm:$0xff]
    %v87 = vld [vmem:[#allocation3 + $0x130] sm:$0xff]
    %v88 = vld [vmem:[#allocation3 + $0x138] sm:$0xff]
    %v89 = vld [vmem:[#allocation3 + $0x140] sm:$0xff]
    %v90 = vld [vmem:[#allocation3 + $0x148] sm:$0xff]
    %v91 = vld [vmem:[#allocation3 + $0x150] sm:$0xff]
    %v92 = vld [vmem:[#allocation3 + $0x158] sm:$0xff]
    %v93 = vld [vmem:[#allocation3 + $0x160] sm:$0xff]
    %v94 = vld [vmem:[#allocation3 + $0x168] sm:$0xff]
    %v95 = vld [vmem:[#allocation3 + $0x170] sm:$0xff]
    %v96 = vld [vmem:[#allocation3 + $0x178] sm:$0xff]
    %s97 = sld [smem:[#allocation2]]
    %v98 = vstv %s97
    %99 = vmatpush.msra.mxu0 %v64
    %100 = vmatpush.msra.mxu0 %v63
    %101 = vmatpush.msra.mxu0 %v62
    %102 = vmatpush.msra.mxu0 %v61
    %103 = vmatpush.msra.mxu0 %v60
    %104 = vmatpush.msra.mxu0 %v59
    %105 = vmatpush.msra.mxu0 %v58
    %106 = vmatpush.msra.mxu0 %v57
    %107 = vmatpush.msra.mxu0 %v56
    %108 = vmatpush.msra.mxu0 %v55
    %109 = vmatpush.msra.mxu0 %v54
    %110 = vmatpush.msra.mxu0 %v53
    %111 = vmatpush.msra.mxu0 %v52
    %112 = vmatpush.msra.mxu0 %v51
    %113 = vmatpush.msra.mxu0 %v50
    %114 = vmatpush.msra.mxu0 %v49
    %115 = vmatmul.f32.gmra.mxu0 %v46
    %v116 = vpop.f32.mrf.mxu0
    %v117 = vadd.f32 %v98, %v116
    %118 = vdwg.mxu0
    %119 = vmatpush.msra.mxu0 %v80
    %120 = vmatpush.msra.mxu0 %v79
    %121 = vmatpush.msra.mxu0 %v78
    %122 = vmatpush.msra.mxu0 %v77
    %123 = vmatpush.msra.mxu0 %v76
    %124 = vmatpush.msra.mxu0 %v75
    %125 = vmatpush.msra.mxu0 %v74
    %126 = vmatpush.msra.mxu0 %v73
    %127 = vmatpush.msra.mxu0 %v72
    %128 = vmatpush.msra.mxu0 %v71
    %129 = vmatpush.msra.mxu0 %v70
    %130 = vmatpush.msra.mxu0 %v69
    %131 = vmatpush.msra.mxu0 %v68
    %132 = vmatpush.msra.mxu0 %v67
    %133 = vmatpush.msra.mxu0 %v66
    %134 = vmatpush.msra.mxu0 %v65
    %135 = vmatmul.f32.gmra.mxu0 %v47
    %v136 = vpop.f32.mrf.mxu0
    %v137 = vadd.f32 %v117, %v136
    %138 = vdwg.mxu0
    %139 = vmatpush.msra.mxu0 %v96
    %140 = vmatpush.msra.mxu0 %v95
    %141 = vmatpush.msra.mxu0 %v94
    %142 = vmatpush.msra.mxu0 %v93
    %143 = vmatpush.msra.mxu0 %v92
    %144 = vmatpush.msra.mxu0 %v91
    %145 = vmatpush.msra.mxu0 %v90
    %146 = vmatpush.msra.mxu0 %v89
    %147 = vmatpush.msra.mxu0 %v88
    %148 = vmatpush.msra.mxu0 %v87
    %149 = vmatpush.msra.mxu0 %v86
    %150 = vmatpush.msra.mxu0 %v85
    %151 = vmatpush.msra.mxu0 %v84
    %152 = vmatpush.msra.mxu0 %v83
    %153 = vmatpush.msra.mxu0 %v82
    %154 = vmatpush.msra.mxu0 %v81
    %155 = vmatmul.f32.gmra.mxu0 %v48
    %v156 = vpop.f32.mrf.mxu0
    %v157 = vadd.f32 %v137, %v156
    %158 = vdwg.mxu0
    %159 = vst [vmem:[#allocation8] sm:$0xff] %v157
    // Predicated region
    $region22: #{tpu_custom_call.1} parent=1 // pred_check
      _
    $region23: #{tpu_custom_call.1} parent=1 // pred_check_branch
      %161 = sbr.rel (0) target = $region25
    $region24: #{tpu_custom_call.1} parent=1 // pred_region
      %163 = vsyncadd [#allocation5], 0
      %s165 = sshll.u32 [#allocation8], 4
      %s166 = int_to_ptr.vmem [resolvable:$true] %s165
      %s167 = sshll.u32 %s3, 4
      %s168 = int_to_ptr.hbm [resolvable:$true] %s167
      %170 = dma.vmem_to_hbm [thread:$0]  %s166, 128, %s168, [#allocation5]
    $region25: #{tpu_custom_call.1} parent=1 // pred_fallthru
      _
    // Predicated region
    $region26: #{tpu_custom_call.1} parent=1 // pred_check
      _
    $region27: #{tpu_custom_call.1} parent=1 // pred_check_branch
      %172 = sbr.rel (0) target = $region29
    $region28: #{tpu_custom_call.1} parent=1 // pred_region
      %174 = dma.done [#allocation5], 128
    $region29: #{tpu_custom_call.1} parent=1 // pred_fallthru
      _
    %175 = vsyncpa [#allocation4], 1
    %176 = vsyncpa [#allocation7], 1
    %177 = vsyncpa [#allocation5], 1

</llo_original>
